<compile_context>
chip_gen: v5e
topology: v5e:2x2
jax: 0.10.0
libtpu: 0.0.40
codegen_flags: <defaults>
</compile_context>

<pallas_src>
import functools

import jax
import jax.numpy as jnp
from jax.experimental import pallas as pl
from jax.experimental.pallas import tpu as pltpu


def _round_up(x, m):
    return ((x + m - 1) // m) * m


def _num_tensorcores():
    """Grid steps to shard across TCs: 1 on v5e/v6e, 2 on megacore/v7x."""
    try:
        return max(1, int(getattr(jax.devices()[0], "num_cores", 1)))
    except Exception:  # pragma: no cover - defensive
        return 1


def actor_kernel(x_ref, w1_ref, b1_ref, w2_ref, b2_ref, w3_ref, b3_ref, out_ref):
    # Everything is in transposed (features, batch) layout: batch = lane axis.
    x_t = x_ref[...]                                            # (S, TB) f32

    # --- fc1 + ReLU: MXU (K = S = 4 padded; MXU is otherwise idle), f32 -----
    h1 = jnp.dot(w1_ref[...], x_t, preferred_element_type=jnp.float32)
    h1 = jnp.maximum(h1 + b1_ref[...], 0.0)                     # (H, TB) f32

    # --- fc2 + ReLU: bf16 MXU inputs, f32 accumulation -----------------------
    h2 = jnp.dot(w2_ref[...], h1.astype(jnp.bfloat16),
                 preferred_element_type=jnp.float32)
    h2 = jnp.maximum(h2 + b2_ref[...], 0.0)                     # (H, TB) f32

    # --- fc3 logits (transposed: (A, TB)) ------------------------------------
    logits = jnp.dot(w3_ref[...], h2.astype(jnp.bfloat16),
                     preferred_element_type=jnp.float32)
    logits = logits + b3_ref[...]                               # (A, TB) f32

    # --- numerically stable softmax over the action (sublane) axis ----------
    # A is tiny and static, so do it with explicit per-action rows on the VPU:
    # full 128-lane occupancy, no cross-lane reductions on the XLU.
    a_dim = logits.shape[0]
    m = logits[0:1, :]
    for a in range(1, a_dim):
        m = jnp.maximum(m, logits[a:a + 1, :])
    es = [jnp.exp(logits[a:a + 1, :] - m) for a in range(a_dim)]
    denom = es[0]
    for e in es[1:]:
        denom = denom + e
    # Exact reciprocal: probabilities must sum to 1 for Categorical sampling.
    inv = pl.reciprocal(denom, approx=False)
    out_ref[...] = jnp.concatenate([e * inv for e in es], axis=0)   # (A, TB)


@functools.partial(jax.jit, static_argnames=("num_tiles",))
def _actor_forward_impl(state, params, *, num_tiles):
    w1, b1 = params["w1"], params["b1"]
    w2, b2 = params["w2"], params["b2"]
    w3, b3 = params["w3"], params["b3"]

    B, S = state.shape
    H = w1.shape[0]
    A = w3.shape[0]

    # Batch tile = lane axis -> must be a multiple of 128.  Choose the tile
    # from the (static) number of grid steps so padding is <= 127 rows/tile.
    tb = _round_up(pl.cdiv(B, num_tiles), 128)
    Bp = num_tiles * tb

    # Transpose to (features, batch) and zero-pad the batch (lane) axis.
    state_t = jnp.pad(state.T, ((0, 0), (0, Bp - B)))           # (S, Bp) f32

    resident = lambda shape: pl.BlockSpec(shape, lambda i: (0, 0))

    out_t = pl.pallas_call(
        actor_kernel,
        out_shape=jax.ShapeDtypeStruct((A, Bp), jnp.float32),
        grid=(num_tiles,),
        in_specs=[
            pl.BlockSpec((S, tb), lambda i: (0, i)),   # state tile (pipelined)
            resident((H, S)),                          # w1 (f32)
            resident((H, 1)),                          # b1
            resident((H, H)),                          # w2 (bf16)
            resident((H, 1)),                          # b2
            resident((A, H)),                          # w3 (bf16)
            resident((A, 1)),                          # b3
        ],
        out_specs=pl.BlockSpec((A, tb), lambda i: (0, i)),       # lane-dense
        compiler_params=pltpu.CompilerParams(
            dimension_semantics=("parallel",)),
    )(state_t, w1, b1, w2, b2, w3, b3)

    return out_t[:, :B].T                                       # (B, A)


def actor_forward(state, params, *, num_tiles=None, max_tile=1024):
    """state: (B, state_size) f32 -> (B, action_size) softmax probabilities."""
    B = state.shape[0]
    if num_tiles is None:
        # One grid step per TensorCore; only more if a tile would exceed
        # max_tile rows (irrelevant for RL-sized batches).
        num_tiles = max(_num_tensorcores(), pl.cdiv(B, max_tile))
    # Never split below one 128-lane tile's worth of rows.
    num_tiles = max(1, min(int(num_tiles), pl.cdiv(B, 128)))
    return _actor_forward_impl(state, params, num_tiles=num_tiles)


def init_actor_params(key, state_size, action_size, hidden_size=128):
    """PyTorch nn.Linear-style init: U(-1/sqrt(fan_in), +1/sqrt(fan_in)).

    Weights are stored in torch's native (out, in) layout (the kernel computes
    W @ x^T, i.e. torch's x @ W^T).  fc2/fc3 weights are bf16 (MXU-native,
    half the DMA bytes); fc1 weight and all biases stay f32 (biases are
    (out, 1) column vectors for the transposed layout).
    """
    def linear(k, fan_in, fan_out, w_dtype):
        kw, kb = jax.random.split(k)
        bound = 1.0 / jnp.sqrt(jnp.asarray(fan_in, jnp.float32))
        w = jax.random.uniform(kw, (fan_out, fan_in), jnp.float32, -bound, bound)
        b = jax.random.uniform(kb, (fan_out, 1), jnp.float32, -bound, bound)
        return w.astype(w_dtype), b

    k1, k2, k3 = jax.random.split(key, 3)
    w1, b1 = linear(k1, state_size, hidden_size, jnp.float32)
    w2, b2 = linear(k2, hidden_size, hidden_size, jnp.bfloat16)
    w3, b3 = linear(k3, hidden_size, action_size, jnp.bfloat16)
    return {"w1": w1, "b1": b1, "w2": w2, "b2": b2, "w3": w3, "b3": b3}


def actor_reference(state, params):
    """Pure-JAX f32 reference (weights upcast) for correctness checking."""
    w1, b1 = params["w1"].astype(jnp.float32), params["b1"][:, 0]
    w2, b2 = params["w2"].astype(jnp.float32), params["b2"][:, 0]
    w3, b3 = params["w3"].astype(jnp.float32), params["b3"][:, 0]
    h1 = jnp.maximum(state @ w1.T + b1, 0.0)
    h2 = jnp.maximum(h1 @ w2.T + b2, 0.0)
    return jax.nn.softmax(h2 @ w3.T + b3, axis=-1)


if __name__ == "__main__":
    key = jax.random.PRNGKey(0)
    k_params, k_state, k_big = jax.random.split(key, 3)

    # CartPole-v1: state_size=4, action_size=2.
    STATE_SIZE, ACTION_SIZE, HIDDEN, BATCH = 4, 2, 128, 64

    params = init_actor_params(k_params, STATE_SIZE, ACTION_SIZE, HIDDEN)
    state = jax.random.normal(k_state, (BATCH, STATE_SIZE), jnp.float32)

    probs = jax.block_until_ready(actor_forward(state, params))
    assert probs.shape == (BATCH, ACTION_SIZE)

    # Exact-divide softmax: rows sum to 1 tightly.
    row_sums = jnp.sum(probs, axis=-1)
    assert bool(jnp.all(jnp.abs(row_sums - 1.0) < 1e-5)), float(
        jnp.max(jnp.abs(row_sums - 1.0)))

    # Matches the pure-JAX f32 reference up to bf16 weight/activation rounding.
    err = float(jnp.max(jnp.abs(probs - actor_reference(state, params))))
    assert err < 3e-2, err

    # Ragged small batch (not a multiple of the 128-lane tile) also works.
    small = jax.block_until_ready(actor_forward(state[:5], params))
    assert small.shape == (5, ACTION_SIZE)
    assert float(jnp.max(jnp.abs(small - probs[:5]))) < 1e-5

    # Explicit two-tile path (what a 2-TC chip auto-selects) on a ragged batch.
    state_big = jax.random.normal(k_big, (300, STATE_SIZE), jnp.float32)
    big = jax.block_until_ready(actor_forward(state_big, params, num_tiles=2))
    assert big.shape == (300, ACTION_SIZE)
    err_big = float(jnp.max(jnp.abs(big - actor_reference(state_big, params))))
    assert err_big < 3e-2, err_big

    print("KERNEL_OK")
</pallas_src>

<mosaic_0001>
module attributes {stable_mosaic.version = 11 : i64} {
  func.func @actor_kernel(%arg0: i32, %arg1: memref<4x128xf32, #tpu.memory_space<vmem>>, %arg2: memref<128x4xf32, #tpu.memory_space<vmem>>, %arg3: memref<128x1xf32, #tpu.memory_space<vmem>>, %arg4: memref<128x128xbf16, #tpu.memory_space<vmem>>, %arg5: memref<128x1xf32, #tpu.memory_space<vmem>>, %arg6: memref<2x128xbf16, #tpu.memory_space<vmem>>, %arg7: memref<2x1xf32, #tpu.memory_space<vmem>>, %arg8: memref<2x128xf32, #tpu.memory_space<vmem>>) attributes {dimension_semantics = [#tpu.dimension_semantics<parallel>], iteration_bounds = array<i64: 1>, scalar_prefetch = 0 : i64, scratch_operands = 0 : i64, tpu.core_type = #tpu.core_type<tc>, window_params = [{transform_indices = @transform_0, window_bounds = array<i64: 4, 128>}, {pipeline_mode = #tpu.pipeline_mode<synchronous>, transform_indices = @transform_1, window_bounds = array<i64: 128, 4>}, {pipeline_mode = #tpu.pipeline_mode<synchronous>, transform_indices = @transform_2, window_bounds = array<i64: 128, 1>}, {pipeline_mode = #tpu.pipeline_mode<synchronous>, transform_indices = @transform_3, window_bounds = array<i64: 128, 128>}, {pipeline_mode = #tpu.pipeline_mode<synchronous>, transform_indices = @transform_4, window_bounds = array<i64: 128, 1>}, {pipeline_mode = #tpu.pipeline_mode<synchronous>, transform_indices = @transform_5, window_bounds = array<i64: 2, 128>}, {pipeline_mode = #tpu.pipeline_mode<synchronous>, transform_indices = @transform_6, window_bounds = array<i64: 2, 1>}, {transform_indices = @transform_7, window_bounds = array<i64: 2, 128>}]} {
    %c0 = arith.constant 0 : index
    %c0_0 = arith.constant 0 : index
    %0 = vector.load %arg1[%c0, %c0_0] : memref<4x128xf32, #tpu.memory_space<vmem>>, vector<4x128xf32>
    %c0_1 = arith.constant 0 : index
    %c0_2 = arith.constant 0 : index
    %1 = vector.load %arg2[%c0_1, %c0_2] : memref<128x4xf32, #tpu.memory_space<vmem>>, vector<128x4xf32>
    %cst = arith.constant dense<0.000000e+00> : vector<128x128xf32>
    %2 = tpu.matmul %1, %0, %cst {dimension_numbers = #tpu.dot_dimension_numbers<[1], [0], [0], [1], [0, 0, 1, 1], [], []>} : vector<128x4xf32>, vector<4x128xf32>, vector<128x128xf32> -> vector<128x128xf32>
    %c0_3 = arith.constant 0 : index
    %c0_4 = arith.constant 0 : index
    %3 = vector.load %arg3[%c0_3, %c0_4] : memref<128x1xf32, #tpu.memory_space<vmem>>, vector<128x1xf32>
    %4 = vector.broadcast %3 : vector<128x1xf32> to vector<128x128xf32>
    %5 = arith.addf %2, %4 : vector<128x128xf32>
    %cst_5 = arith.constant 0.000000e+00 : f32
    %6 = vector.broadcast %cst_5 : f32 to vector<128x128xf32>
    %7 = arith.maximumf %5, %6 : vector<128x128xf32>
    %c0_6 = arith.constant 0 : index
    %c0_7 = arith.constant 0 : index
    %8 = vector.load %arg4[%c0_6, %c0_7] : memref<128x128xbf16, #tpu.memory_space<vmem>>, vector<128x128xbf16>
    %9 = arith.truncf %7 : vector<128x128xf32> to vector<128x128xbf16>
    %cst_8 = arith.constant dense<0.000000e+00> : vector<128x128xf32>
    %10 = tpu.matmul %8, %9, %cst_8 {dimension_numbers = #tpu.dot_dimension_numbers<[1], [0], [0], [1], [0, 0, 1, 1], [], []>} : vector<128x128xbf16>, vector<128x128xbf16>, vector<128x128xf32> -> vector<128x128xf32>
    %c0_9 = arith.constant 0 : index
    %c0_10 = arith.constant 0 : index
    %11 = vector.load %arg5[%c0_9, %c0_10] : memref<128x1xf32, #tpu.memory_space<vmem>>, vector<128x1xf32>
    %12 = vector.broadcast %11 : vector<128x1xf32> to vector<128x128xf32>
    %13 = arith.addf %10, %12 : vector<128x128xf32>
    %cst_11 = arith.constant 0.000000e+00 : f32
    %14 = vector.broadcast %cst_11 : f32 to vector<128x128xf32>
    %15 = arith.maximumf %13, %14 : vector<128x128xf32>
    %c0_12 = arith.constant 0 : index
    %c0_13 = arith.constant 0 : index
    %16 = vector.load %arg6[%c0_12, %c0_13] : memref<2x128xbf16, #tpu.memory_space<vmem>>, vector<2x128xbf16>
    %17 = arith.truncf %15 : vector<128x128xf32> to vector<128x128xbf16>
    %cst_14 = arith.constant dense<0.000000e+00> : vector<2x128xf32>
    %18 = tpu.matmul %16, %17, %cst_14 {dimension_numbers = #tpu.dot_dimension_numbers<[1], [0], [0], [1], [0, 0, 1, 1], [], []>} : vector<2x128xbf16>, vector<128x128xbf16>, vector<2x128xf32> -> vector<2x128xf32>
    %c0_15 = arith.constant 0 : index
    %c0_16 = arith.constant 0 : index
    %19 = vector.load %arg7[%c0_15, %c0_16] : memref<2x1xf32, #tpu.memory_space<vmem>>, vector<2x1xf32>
    %20 = vector.broadcast %19 : vector<2x1xf32> to vector<2x128xf32>
    %21 = arith.addf %18, %20 : vector<2x128xf32>
    %22 = vector.extract_strided_slice %21 {offsets = [0, 0], sizes = [1, 128], strides = [1, 1]} : vector<2x128xf32> to vector<1x128xf32>
    %23 = vector.extract_strided_slice %21 {offsets = [1, 0], sizes = [1, 128], strides = [1, 1]} : vector<2x128xf32> to vector<1x128xf32>
    %24 = arith.maximumf %22, %23 : vector<1x128xf32>
    %25 = vector.extract_strided_slice %21 {offsets = [0, 0], sizes = [1, 128], strides = [1, 1]} : vector<2x128xf32> to vector<1x128xf32>
    %26 = arith.subf %25, %24 : vector<1x128xf32>
    %27 = math.exp %26 : vector<1x128xf32>
    %28 = vector.extract_strided_slice %21 {offsets = [1, 0], sizes = [1, 128], strides = [1, 1]} : vector<2x128xf32> to vector<1x128xf32>
    %29 = arith.subf %28, %24 : vector<1x128xf32>
    %30 = math.exp %29 : vector<1x128xf32>
    %31 = arith.addf %27, %30 : vector<1x128xf32>
    %32 = tpu.reciprocal %31 : vector<1x128xf32> -> vector<1x128xf32>
    %33 = arith.mulf %27, %32 : vector<1x128xf32>
    %34 = arith.mulf %30, %32 : vector<1x128xf32>
    %35 = tpu.concatenate %33, %34 in 0 : vector<1x128xf32>, vector<1x128xf32> -> vector<2x128xf32>
    %c0_17 = arith.constant 0 : index
    %c0_18 = arith.constant 0 : index
    %36 = vector.load %arg8[%c0_17, %c0_18] : memref<2x128xf32, #tpu.memory_space<vmem>>, vector<2x128xf32>
    tpu.vector_store %arg8[%c0_17, %c0_18], %35 {strides = array<i32>} : memref<2x128xf32, #tpu.memory_space<vmem>>, vector<2x128xf32>,
    return
  }
  func.func @transform_0(%arg0: i32) -> (i32, i32) {
    %c0_i32 = arith.constant 0 : i32
    %c0_i32_0 = arith.constant 0 : i32
    return %c0_i32, %arg0 : i32, i32
  }
  func.func @transform_1(%arg0: i32) -> (i32, i32) {
    %c0_i32 = arith.constant 0 : i32
    %c0_i32_0 = arith.constant 0 : i32
    %c0_i32_1 = arith.constant 0 : i32
    return %c0_i32, %c0_i32_0 : i32, i32
  }
  func.func @transform_2(%arg0: i32) -> (i32, i32) {
    %c0_i32 = arith.constant 0 : i32
    %c0_i32_0 = arith.constant 0 : i32
    %c0_i32_1 = arith.constant 0 : i32
    return %c0_i32, %c0_i32_0 : i32, i32
  }
  func.func @transform_3(%arg0: i32) -> (i32, i32) {
    %c0_i32 = arith.constant 0 : i32
    %c0_i32_0 = arith.constant 0 : i32
    %c0_i32_1 = arith.constant 0 : i32
    return %c0_i32, %c0_i32_0 : i32, i32
  }
  func.func @transform_4(%arg0: i32) -> (i32, i32) {
    %c0_i32 = arith.constant 0 : i32
    %c0_i32_0 = arith.constant 0 : i32
    %c0_i32_1 = arith.constant 0 : i32
    return %c0_i32, %c0_i32_0 : i32, i32
  }
  func.func @transform_5(%arg0: i32) -> (i32, i32) {
    %c0_i32 = arith.constant 0 : i32
    %c0_i32_0 = arith.constant 0 : i32
    %c0_i32_1 = arith.constant 0 : i32
    return %c0_i32, %c0_i32_0 : i32, i32
  }
  func.func @transform_6(%arg0: i32) -> (i32, i32) {
    %c0_i32 = arith.constant 0 : i32
    %c0_i32_0 = arith.constant 0 : i32
    %c0_i32_1 = arith.constant 0 : i32
    return %c0_i32, %c0_i32_0 : i32, i32
  }
  func.func @transform_7(%arg0: i32) -> (i32, i32) {
    %c0_i32 = arith.constant 0 : i32
    %c0_i32_0 = arith.constant 0 : i32
    return %c0_i32, %arg0 : i32, i32
  }
}

</mosaic_0001>

<llo_original>
// kernel: _actor_forward_impl.1
$region0: #{_actor_forward_impl.1}
  #allocation0 [shape = 'u32[]', space=smem, size = 0x4, offset = 0x4, fixed_abs, tag = 'smem constant byte address 0x4 - core index']
  #allocation1 [shape = 'u32[72,128]{1,0:T(1,128)}', space=vmem, size = 0x9000, scoped, tag = 'internal scratch']
  %s0 = inlined_call_operand.vmem [shape: f32[4,128], index: 0, kind: input, shape index: {}]
  %s1 = inlined_call_operand.vmem [shape: f32[128,4], index: 1, kind: input, shape index: {}]
  %s2 = inlined_call_operand.vmem [shape: f32[128,1], index: 2, kind: input, shape index: {}]
  %s3 = inlined_call_operand.vmem [shape: bf16[128,128], index: 3, kind: input, shape index: {}]
  %s4 = inlined_call_operand.vmem [shape: f32[128,1], index: 4, kind: input, shape index: {}]
  %s5 = inlined_call_operand.vmem [shape: bf16[2,128], index: 5, kind: input, shape index: {}]
  %s6 = inlined_call_operand.vmem [shape: f32[2,1], index: 6, kind: input, shape index: {}]
  %s7 = inlined_call_operand.vmem [shape: f32[2,128], index: 7, kind: output, shape index: {}]
  %s8 = sld [smem:[#allocation0]]
  $region38: #{_actor_forward_impl.1} parent=0
    _
  %s10 = ssub.s32 1, %s8
  %s11 = scalar_select 0, %s10, %s8
  // Predicated region
  $region2: #{_actor_forward_impl.1} parent=0 // pred_check
    _
  $region3: #{_actor_forward_impl.1} parent=0 // pred_check_branch
    %13 = sbr.rel (0) target = $region5
  $region4: #{_actor_forward_impl.1} parent=0 // pred_region
    _
  $region5: #{_actor_forward_impl.1} parent=0 // pred_fallthru
    _
  // Predicated region
  $region6: #{_actor_forward_impl.1} parent=0 // pred_check
    _
  $region7: #{_actor_forward_impl.1} parent=0 // pred_check_branch
    %15 = sbr.rel (0) target = $region9
  $region8: #{_actor_forward_impl.1} parent=0 // pred_region
    _
  $region9: #{_actor_forward_impl.1} parent=0 // pred_fallthru
    _
  // Predicated region
  $region10: #{_actor_forward_impl.1} parent=0 // pred_check
    _
  $region11: #{_actor_forward_impl.1} parent=0 // pred_check_branch
    %17 = sbr.rel (0) target = $region13
  $region12: #{_actor_forward_impl.1} parent=0 // pred_region
    _
  $region13: #{_actor_forward_impl.1} parent=0 // pred_fallthru
    _
  // Predicated region
  $region14: #{_actor_forward_impl.1} parent=0 // pred_check
    _
  $region15: #{_actor_forward_impl.1} parent=0 // pred_check_branch
    %19 = sbr.rel (0) target = $region17
  $region16: #{_actor_forward_impl.1} parent=0 // pred_region
    _
  $region17: #{_actor_forward_impl.1} parent=0 // pred_fallthru
    _
  // Predicated region
  $region18: #{_actor_forward_impl.1} parent=0 // pred_check
    _
  $region19: #{_actor_forward_impl.1} parent=0 // pred_check_branch
    %21 = sbr.rel (0) target = $region21
  $region20: #{_actor_forward_impl.1} parent=0 // pred_region
    _
  $region21: #{_actor_forward_impl.1} parent=0 // pred_fallthru
    _
  // Predicated region
  $region22: #{_actor_forward_impl.1} parent=0 // pred_check
    _
  $region23: #{_actor_forward_impl.1} parent=0 // pred_check_branch
    %23 = sbr.rel (0) target = $region25
  $region24: #{_actor_forward_impl.1} parent=0 // pred_region
    _
  $region25: #{_actor_forward_impl.1} parent=0 // pred_fallthru
    _
  // Predicated region
  $region26: #{_actor_forward_impl.1} parent=0 // pred_check
    _
  $region27: #{_actor_forward_impl.1} parent=0 // pred_check_branch
    %25 = sbr.rel (0) target = $region29
  $region28: #{_actor_forward_impl.1} parent=0 // pred_region
    _
  $region29: #{_actor_forward_impl.1} parent=0 // pred_fallthru
    _
  %v26 = vld [vmem:[%s0] sm:$0xf]
  %v27 = vld [vmem:[%s1] sm:$0xff]
  %v28 = vld [vmem:[%s1 + $0x8] sm:$0xff]
  %v29 = vld [vmem:[%s1 + $0x10] sm:$0xff]
  %v30 = vld [vmem:[%s1 + $0x18] sm:$0xff]
  %v31 = vld [vmem:[%s1 + $0x20] sm:$0xff]
  %v32 = vld [vmem:[%s1 + $0x28] sm:$0xff]
  %v33 = vld [vmem:[%s1 + $0x30] sm:$0xff]
  %v34 = vld [vmem:[%s1 + $0x38] sm:$0xff]
  %v35 = vld [vmem:[%s1 + $0x40] sm:$0xff]
  %v36 = vld [vmem:[%s1 + $0x48] sm:$0xff]
  %v37 = vld [vmem:[%s1 + $0x50] sm:$0xff]
  %v38 = vld [vmem:[%s1 + $0x58] sm:$0xff]
  %v39 = vld [vmem:[%s1 + $0x60] sm:$0xff]
  %v40 = vld [vmem:[%s1 + $0x68] sm:$0xff]
  %v41 = vld [vmem:[%s1 + $0x70] sm:$0xff]
  %v42 = vld [vmem:[%s1 + $0x78] sm:$0xff]
  %v43 = vld [vmem:[%s2] sm:$0xff]
  %v44 = vld [vmem:[%s2 + $0x8] sm:$0xff]
  %v45 = vld [vmem:[%s2 + $0x10] sm:$0xff]
  %v46 = vld [vmem:[%s2 + $0x18] sm:$0xff]
  %v47 = vld [vmem:[%s2 + $0x20] sm:$0xff]
  %v48 = vld [vmem:[%s2 + $0x28] sm:$0xff]
  %v49 = vld [vmem:[%s2 + $0x30] sm:$0xff]
  %v50 = vld [vmem:[%s2 + $0x38] sm:$0xff]
  %v51 = vld [vmem:[%s2 + $0x40] sm:$0xff]
  %v52 = vld [vmem:[%s2 + $0x48] sm:$0xff]
  %v53 = vld [vmem:[%s2 + $0x50] sm:$0xff]
  %v54 = vld [vmem:[%s2 + $0x58] sm:$0xff]
  %v55 = vld [vmem:[%s2 + $0x60] sm:$0xff]
  %v56 = vld [vmem:[%s2 + $0x68] sm:$0xff]
  %v57 = vld [vmem:[%s2 + $0x70] sm:$0xff]
  %v58 = vld [vmem:[%s2 + $0x78] sm:$0xff]
  %60 = vset.pattern.permute.xlu0 0
  %61 = vperm.xlu0 %60, %v43
  %v62 = vpop.permute.xlu0 %61
  %65 = vset.pattern.permute.xlu0 0
  %66 = vperm.xlu0 %65, %v44
  %v67 = vpop.permute.xlu0 %66
  %70 = vset.pattern.permute.xlu0 0
  %71 = vperm.xlu0 %70, %v45
  %v72 = vpop.permute.xlu0 %71
  %75 = vset.pattern.permute.xlu0 0
  %76 = vperm.xlu0 %75, %v46
  %v77 = vpop.permute.xlu0 %76
  %80 = vset.pattern.permute.xlu0 0
  %81 = vperm.xlu0 %80, %v47
  %v82 = vpop.permute.xlu0 %81
  %85 = vset.pattern.permute.xlu0 0
  %86 = vperm.xlu0 %85, %v48
  %v87 = vpop.permute.xlu0 %86
  %90 = vset.pattern.permute.xlu0 0
  %91 = vperm.xlu0 %90, %v49
  %v92 = vpop.permute.xlu0 %91
  %95 = vset.pattern.permute.xlu0 0
  %96 = vperm.xlu0 %95, %v50
  %v97 = vpop.permute.xlu0 %96
  %100 = vset.pattern.permute.xlu0 0
  %101 = vperm.xlu0 %100, %v51
  %v102 = vpop.permute.xlu0 %101
  %105 = vset.pattern.permute.xlu0 0
  %106 = vperm.xlu0 %105, %v52
  %v107 = vpop.permute.xlu0 %106
  %110 = vset.pattern.permute.xlu0 0
  %111 = vperm.xlu0 %110, %v53
  %v112 = vpop.permute.xlu0 %111
  %115 = vset.pattern.permute.xlu0 0
  %116 = vperm.xlu0 %115, %v54
  %v117 = vpop.permute.xlu0 %116
  %120 = vset.pattern.permute.xlu0 0
  %121 = vperm.xlu0 %120, %v55
  %v122 = vpop.permute.xlu0 %121
  %125 = vset.pattern.permute.xlu0 0
  %126 = vperm.xlu0 %125, %v56
  %v127 = vpop.permute.xlu0 %126
  %130 = vset.pattern.permute.xlu0 0
  %131 = vperm.xlu0 %130, %v57
  %v132 = vpop.permute.xlu0 %131
  %135 = vset.pattern.permute.xlu0 0
  %136 = vperm.xlu0 %135, %v58
  %v137 = vpop.permute.xlu0 %136
  %vm139 = vcmask 31744
  %v141 = vsel %vm139, %v27, 0
  %v144 = vsel %vm139, %v28, 0
  %v147 = vsel %vm139, %v29, 0
  %v150 = vsel %vm139, %v30, 0
  %v153 = vsel %vm139, %v31, 0
  %v156 = vsel %vm139, %v32, 0
  %v159 = vsel %vm139, %v33, 0
  %v162 = vsel %vm139, %v34, 0
  %v165 = vsel %vm139, %v35, 0
  %v168 = vsel %vm139, %v36, 0
  %v171 = vsel %vm139, %v37, 0
  %v174 = vsel %vm139, %v38, 0
  %v177 = vsel %vm139, %v39, 0
  %v180 = vsel %vm139, %v40, 0
  %v183 = vsel %vm139, %v41, 0
  %v186 = vsel %vm139, %v42, 0
  %vm188 = vcmask 1043456
  %v190 = vsel %vm188, %v26, 0
  %192 = vmatpush.msra.mxu0 0.0
  %193 = vmatpush.msra.mxu0 0.0
  %194 = vmatpush.msra.mxu0 0.0
  %195 = vmatpush.msra.mxu0 0.0
  %196 = vmatpush.msra.mxu0 0.0
  %197 = vmatpush.msra.mxu0 0.0
  %198 = vmatpush.msra.mxu0 0.0
  %199 = vmatpush.msra.mxu0 0.0
  %200 = vmatpush.msra.mxu0 0.0
  %201 = vmatpush.msra.mxu0 0.0
  %202 = vmatpush.msra.mxu0 0.0
  %203 = vmatpush.msra.mxu0 0.0
  %204 = vmatpush.msra.mxu0 0.0
  %205 = vmatpush.msra.mxu0 0.0
  %206 = vmatpush.msra.mxu0 0.0
  %207 = vmatpush.msra.mxu0 %v190
  %208 = vmatmul.f32.gmra.mxu0 %v141
  %v209 = vpop.f32.mrf.mxu0
  %v210 = vadd.f32 %v62, %v209
  %211 = vmatmul.f32.gmra.mxu0 %v144
  %v212 = vpop.f32.mrf.mxu0
  %v213 = vadd.f32 %v67, %v212
  %214 = vmatmul.f32.gmra.mxu0 %v147
  %v215 = vpop.f32.mrf.mxu0
  %v216 = vadd.f32 %v72, %v215
  %217 = vmatmul.f32.gmra.mxu0 %v150
  %v218 = vpop.f32.mrf.mxu0
  %v219 = vadd.f32 %v77, %v218
  %220 = vmatmul.f32.gmra.mxu0 %v153
  %v221 = vpop.f32.mrf.mxu0
  %v222 = vadd.f32 %v82, %v221
  %223 = vmatmul.f32.gmra.mxu0 %v156
  %v224 = vpop.f32.mrf.mxu0
  %v225 = vadd.f32 %v87, %v224
  %226 = vmatmul.f32.gmra.mxu0 %v159
  %v227 = vpop.f32.mrf.mxu0
  %v228 = vadd.f32 %v92, %v227
  %229 = vmatmul.f32.gmra.mxu0 %v162
  %v230 = vpop.f32.mrf.mxu0
  %v231 = vadd.f32 %v97, %v230
  %232 = vmatmul.f32.gmra.mxu0 %v165
  %v233 = vpop.f32.mrf.mxu0
  %v234 = vadd.f32 %v102, %v233
  %235 = vmatmul.f32.gmra.mxu0 %v168
  %v236 = vpop.f32.mrf.mxu0
  %v237 = vadd.f32 %v107, %v236
  %238 = vmatmul.f32.gmra.mxu0 %v171
  %v239 = vpop.f32.mrf.mxu0
  %v240 = vadd.f32 %v112, %v239
  %241 = vmatmul.f32.gmra.mxu0 %v174
  %v242 = vpop.f32.mrf.mxu0
  %v243 = vadd.f32 %v117, %v242
  %244 = vmatmul.f32.gmra.mxu0 %v177
  %v245 = vpop.f32.mrf.mxu0
  %v246 = vadd.f32 %v122, %v245
  %247 = vmatmul.f32.gmra.mxu0 %v180
  %v248 = vpop.f32.mrf.mxu0
  %v249 = vadd.f32 %v127, %v248
  %250 = vmatmul.f32.gmra.mxu0 %v183
  %v251 = vpop.f32.mrf.mxu0
  %v252 = vadd.f32 %v132, %v251
  %253 = vmatmul.f32.gmra.mxu0 %v186
  %v254 = vpop.f32.mrf.mxu0
  %v255 = vadd.f32 %v137, %v254
  %256 = vdwg.mxu0
  %v257 = vmax.f32 %v210, 0.0
  %v258 = vmax.f32 %v213, 0.0
  %v259 = vmax.f32 %v216, 0.0
  %v260 = vmax.f32 %v219, 0.0
  %v261 = vmax.f32 %v222, 0.0
  %v262 = vmax.f32 %v225, 0.0
  %v263 = vmax.f32 %v228, 0.0
  %v264 = vmax.f32 %v231, 0.0
  %v265 = vmax.f32 %v234, 0.0
  %v266 = vmax.f32 %v237, 0.0
  %v267 = vmax.f32 %v240, 0.0
  %v268 = vmax.f32 %v243, 0.0
  %v269 = vmax.f32 %v246, 0.0
  %v270 = vmax.f32 %v249, 0.0
  %v271 = vmax.f32 %v252, 0.0
  %v272 = vmax.f32 %v255, 0.0
  %v273 = vld [vmem:[%s3] sm:$0xf]
  %v274 = vld [vmem:[%s3 + $0x4] sm:$0xf]
  %v275 = vld [vmem:[%s3 + $0x8] sm:$0xf]
  %v276 = vld [vmem:[%s3 + $0xc] sm:$0xf]
  %v277 = vld [vmem:[%s3 + $0x10] sm:$0xf]
  %v278 = vld [vmem:[%s3 + $0x14] sm:$0xf]
  %v279 = vld [vmem:[%s3 + $0x18] sm:$0xf]
  %v280 = vld [vmem:[%s3 + $0x1c] sm:$0xf]
  %v281 = vld [vmem:[%s3 + $0x20] sm:$0xf]
  %v282 = vld [vmem:[%s3 + $0x24] sm:$0xf]
  %v283 = vld [vmem:[%s3 + $0x28] sm:$0xf]
  %v284 = vld [vmem:[%s3 + $0x2c] sm:$0xf]
  %v285 = vld [vmem:[%s3 + $0x30] sm:$0xf]
  %v286 = vld [vmem:[%s3 + $0x34] sm:$0xf]
  %v287 = vld [vmem:[%s3 + $0x38] sm:$0xf]
  %v288 = vld [vmem:[%s3 + $0x3c] sm:$0xf]
  %v289 = vpack.c.bf16 %v258, %v257
  %v290 = vpack.c.bf16 %v260, %v259
  %v291 = vpack.c.bf16 %v262, %v261
  %v292 = vpack.c.bf16 %v264, %v263
  %v293 = vpack.c.bf16 %v266, %v265
  %v294 = vpack.c.bf16 %v268, %v267
  %v295 = vpack.c.bf16 %v270, %v269
  %v296 = vpack.c.bf16 %v272, %v271
  %v297 = vld [vmem:[%s4] sm:$0xff]
  %v298 = vld [vmem:[%s4 + $0x8] sm:$0xff]
  %v299 = vld [vmem:[%s4 + $0x10] sm:$0xff]
  %v300 = vld [vmem:[%s4 + $0x18] sm:$0xff]
  %v301 = vld [vmem:[%s4 + $0x20] sm:$0xff]
  %v302 = vld [vmem:[%s4 + $0x28] sm:$0xff]
  %v303 = vld [vmem:[%s4 + $0x30] sm:$0xff]
  %v304 = vld [vmem:[%s4 + $0x38] sm:$0xff]
  %v305 = vld [vmem:[%s4 + $0x40] sm:$0xff]
  %v306 = vld [vmem:[%s4 + $0x48] sm:$0xff]
  %v307 = vld [vmem:[%s4 + $0x50] sm:$0xff]
  %v308 = vld [vmem:[%s4 + $0x58] sm:$0xff]
  %v309 = vld [vmem:[%s4 + $0x60] sm:$0xff]
  %v310 = vld [vmem:[%s4 + $0x68] sm:$0xff]
  %v311 = vld [vmem:[%s4 + $0x70] sm:$0xff]
  %v312 = vld [vmem:[%s4 + $0x78] sm:$0xff]
  %314 = vset.pattern.permute.xlu0 0
  %315 = vperm.xlu0 %314, %v297
  %v316 = vpop.permute.xlu0 %315
  %319 = vset.pattern.permute.xlu0 0
  %320 = vperm.xlu0 %319, %v298
  %v321 = vpop.permute.xlu0 %320
  %324 = vset.pattern.permute.xlu0 0
  %325 = vperm.xlu0 %324, %v299
  %v326 = vpop.permute.xlu0 %325
  %329 = vset.pattern.permute.xlu0 0
  %330 = vperm.xlu0 %329, %v300
  %v331 = vpop.permute.xlu0 %330
  %334 = vset.pattern.permute.xlu0 0
  %335 = vperm.xlu0 %334, %v301
  %v336 = vpop.permute.xlu0 %335
  %339 = vset.pattern.permute.xlu0 0
  %340 = vperm.xlu0 %339, %v302
  %v341 = vpop.permute.xlu0 %340
  %344 = vset.pattern.permute.xlu0 0
  %345 = vperm.xlu0 %344, %v303
  %v346 = vpop.permute.xlu0 %345
  %349 = vset.pattern.permute.xlu0 0
  %350 = vperm.xlu0 %349, %v304
  %v351 = vpop.permute.xlu0 %350
  %354 = vset.pattern.permute.xlu0 0
  %355 = vperm.xlu0 %354, %v305
  %v356 = vpop.permute.xlu0 %355
  %359 = vset.pattern.permute.xlu0 0
  %360 = vperm.xlu0 %359, %v306
  %v361 = vpop.permute.xlu0 %360
  %364 = vset.pattern.permute.xlu0 0
  %365 = vperm.xlu0 %364, %v307
  %v366 = vpop.permute.xlu0 %365
  %369 = vset.pattern.permute.xlu0 0
  %370 = vperm.xlu0 %369, %v308
  %v371 = vpop.permute.xlu0 %370
  %374 = vset.pattern.permute.xlu0 0
  %375 = vperm.xlu0 %374, %v309
  %v376 = vpop.permute.xlu0 %375
  %379 = vset.pattern.permute.xlu0 0
  %380 = vperm.xlu0 %379, %v310
  %v381 = vpop.permute.xlu0 %380
  %384 = vset.pattern.permute.xlu0 0
  %385 = vperm.xlu0 %384, %v311
  %v386 = vpop.permute.xlu0 %385
  %389 = vset.pattern.permute.xlu0 0
  %390 = vperm.xlu0 %389, %v312
  %v391 = vpop.permute.xlu0 %390
  %v409 = vunpack.c.l.b16 %v273
  %v410 = vunpack.c.l.b16 %v274
  %v411 = vunpack.c.l.b16 %v275
  %v412 = vunpack.c.l.b16 %v276
  %v413 = vunpack.c.l.b16 %v277
  %v414 = vunpack.c.l.b16 %v278
  %v415 = vunpack.c.l.b16 %v279
  %v416 = vunpack.c.l.b16 %v280
  %v417 = vunpack.c.l.b16 %v281
  %v418 = vunpack.c.l.b16 %v282
  %v419 = vunpack.c.l.b16 %v283
  %v420 = vunpack.c.l.b16 %v284
  %v421 = vunpack.c.l.b16 %v285
  %v422 = vunpack.c.l.b16 %v286
  %v423 = vunpack.c.l.b16 %v287
  %v424 = vunpack.c.l.b16 %v288
  %v425 = vpack.c.b16 %v410, %v409
  %v426 = vpack.c.b16 %v412, %v411
  %v427 = vpack.c.b16 %v414, %v413
  %v428 = vpack.c.b16 %v416, %v415
  %v429 = vpack.c.b16 %v418, %v417
  %v430 = vpack.c.b16 %v420, %v419
  %v431 = vpack.c.b16 %v422, %v421
  %v432 = vpack.c.b16 %v424, %v423
  %441 = vmatpush.bf16.msra.mxu0 %v296
  %442 = vmatpush.bf16.msra.mxu0 %v295
  %443 = vmatpush.bf16.msra.mxu0 %v294
  %444 = vmatpush.bf16.msra.mxu0 %v293
  %445 = vmatpush.bf16.msra.mxu0 %v292
  %446 = vmatpush.bf16.msra.mxu0 %v291
  %447 = vmatpush.bf16.msra.mxu0 %v290
  %448 = vmatpush.bf16.msra.mxu0 %v289
  %449 = vmatmul.bf16.gmra.mxu0 %v425
  %v450 = vpop.f32.mrf.mxu0
  %v451 = vadd.f32 %v316, %v450
  %v452 = vpop.f32.mrf.mxu0
  %v453 = vadd.f32 %v321, %v452
  %454 = vmatmul.bf16.gmra.mxu0 %v426
  %v455 = vpop.f32.mrf.mxu0
  %v456 = vadd.f32 %v326, %v455
  %v457 = vpop.f32.mrf.mxu0
  %v458 = vadd.f32 %v331, %v457
  %459 = vmatmul.bf16.gmra.mxu0 %v427
  %v460 = vpop.f32.mrf.mxu0
  %v461 = vadd.f32 %v336, %v460
  %v462 = vpop.f32.mrf.mxu0
  %v463 = vadd.f32 %v341, %v462
  %464 = vmatmul.bf16.gmra.mxu0 %v428
  %v465 = vpop.f32.mrf.mxu0
  %v466 = vadd.f32 %v346, %v465
  %v467 = vpop.f32.mrf.mxu0
  %v468 = vadd.f32 %v351, %v467
  %469 = vmatmul.bf16.gmra.mxu0 %v429
  %v470 = vpop.f32.mrf.mxu0
  %v471 = vadd.f32 %v356, %v470
  %v472 = vpop.f32.mrf.mxu0
  %v473 = vadd.f32 %v361, %v472
  %474 = vmatmul.bf16.gmra.mxu0 %v430
  %v475 = vpop.f32.mrf.mxu0
  %v476 = vadd.f32 %v366, %v475
  %v477 = vpop.f32.mrf.mxu0
  %v478 = vadd.f32 %v371, %v477
  %479 = vmatmul.bf16.gmra.mxu0 %v431
  %v480 = vpop.f32.mrf.mxu0
  %v481 = vadd.f32 %v376, %v480
  %v482 = vpop.f32.mrf.mxu0
  %v483 = vadd.f32 %v381, %v482
  %484 = vmatmul.bf16.gmra.mxu0 %v432
  %v485 = vpop.f32.mrf.mxu0
  %v486 = vadd.f32 %v386, %v485
  %v487 = vpop.f32.mrf.mxu0
  %v488 = vadd.f32 %v391, %v487
  %489 = vdwg.mxu0
  %v490 = vmax.f32 %v451, 0.0
  %v491 = vmax.f32 %v453, 0.0
  %v492 = vmax.f32 %v456, 0.0
  %v493 = vmax.f32 %v458, 0.0
  %v494 = vmax.f32 %v461, 0.0
  %v495 = vmax.f32 %v463, 0.0
  %v496 = vmax.f32 %v466, 0.0
  %v497 = vmax.f32 %v468, 0.0
  %v498 = vmax.f32 %v471, 0.0
  %v499 = vmax.f32 %v473, 0.0
  %v500 = vmax.f32 %v476, 0.0
  %v501 = vmax.f32 %v478, 0.0
  %v502 = vmax.f32 %v481, 0.0
  %v503 = vmax.f32 %v483, 0.0
  %v504 = vmax.f32 %v486, 0.0
  %v505 = vmax.f32 %v488, 0.0
  %v506 = vld [vmem:[%s5] sm:$0x1]
  %v507 = vpack.c.bf16 %v491, %v490
  %v508 = vpack.c.bf16 %v493, %v492
  %v509 = vpack.c.bf16 %v495, %v494
  %v510 = vpack.c.bf16 %v497, %v496
  %v511 = vpack.c.bf16 %v499, %v498
  %v512 = vpack.c.bf16 %v501, %v500
  %v513 = vpack.c.bf16 %v503, %v502
  %v514 = vpack.c.bf16 %v505, %v504
  %v515 = vld [vmem:[%s6] sm:$0x3]
  %517 = vset.pattern.permute.xlu0 0
  %518 = vperm.xlu0 %517, %v515
  %v519 = vpop.permute.xlu0 %518
  %521 = vmatpush.bf16.msra.mxu0 %v514
  %522 = vmatpush.bf16.msra.mxu0 %v513
  %523 = vmatpush.bf16.msra.mxu0 %v512
  %524 = vmatpush.bf16.msra.mxu0 %v511
  %525 = vmatpush.bf16.msra.mxu0 %v510
  %526 = vmatpush.bf16.msra.mxu0 %v509
  %527 = vmatpush.bf16.msra.mxu0 %v508
  %528 = vmatpush.bf16.msra.mxu0 %v507
  %529 = vmatmul.bf16.gmra.mxu0 %v506
  %v530 = vpop.f32.mrf.mxu0
  %v531 = vadd.f32 %v519, %v530
  %v532 = vpop.f32.mrf.mxu0
  %533 = vdwg.mxu0
  %v535 = vrot.slane %v531, 1
  %v537 = vmax.f32 %v531, %v535
  %v538 = vsub.f32 %v531, %v537
  %v539 = vmul.f32 %v538, 1.442695
  %v540 = vpow.pop %v539
  %v542 = vrot.slane %v537, 7
  %v544 = vsub.f32 %v531, %v542
  %v545 = vmul.f32 %v544, 1.442695
  %v546 = vpow.pop %v545
  %v548 = vrot.slane %v546, 1
  %v550 = vadd.f32 %v540, %v548
  %v551 = vrcp.pop %v550
  %v552 = vmul.f32 %v550, %v551
  %v553 = vsub.f32 1.0, %v552
  %v554 = vmul.f32 %v551, %v553
  %v555 = vadd.f32 %v551, %v554
  %vm556 = vweird.f32 %v550
  %vm557 = vweird.f32 %v551
  %vm558 = vmor %vm556, %vm557
  %v559 = vsel %vm558, %v551, %v555
  %v560 = vand.u32 2147483647, %v550
  %vm561 = vcmp.eq.f32.partialorder %v560, 8.507059e+37
  %v562 = vand.u32 %v550, 2147483648
  %v563 = vor.u32 1.1754944e-38, %v562
  %v564 = vsel %vm561, %v563, %v559
  %v565 = vmul.f32 %v540, %v564
  %v567 = vrot.slane %v564, 7
  %v569 = vmul.f32 %v546, %v567
  %vm570 = vcmask 1040384
  %v571 = vsel %vm570, %v565, %v569
  %572 = vst [vmem:[%s7] sm:$0x3] %v571
  // Predicated region
  $region30: #{_actor_forward_impl.1} parent=0 // pred_check
    _
  $region31: #{_actor_forward_impl.1} parent=0 // pred_check_branch
    %574 = sbr.rel (0) target = $region33
  $region32: #{_actor_forward_impl.1} parent=0 // pred_region
    _
  $region33: #{_actor_forward_impl.1} parent=0 // pred_fallthru
    _
  // Predicated region
  $region34: #{_actor_forward_impl.1} parent=0 // pred_check
    _
  $region35: #{_actor_forward_impl.1} parent=0 // pred_check_branch
    %576 = sbr.rel (0) target = $region37
  $region36: #{_actor_forward_impl.1} parent=0 // pred_region
    _
  $region37: #{_actor_forward_impl.1} parent=0 // pred_fallthru
    _

</llo_original>
